<compile_context>
chip_gen: v7x
topology: tpu7x:2x2x1
jax: 0.10.0
libtpu: 0.0.40
codegen_flags: <defaults>
</compile_context>

<pallas_src>
import jax
import jax.numpy as jnp
from jax.experimental import pallas as pl
from jax.experimental.pallas import tpu as pltpu

N = 41
HID = N // 4          # 10
IN_FEATS = N + 1      # 42: row 0 = lambda, rows 1..41 = f features


def _green_kernel(x_ref, w1_ref, wstack_ref, bstack_ref, gw1_ref, gw2_ref,
                  out_ref):
    x = x_ref[...]                                   # (42, TB)
    lam = x[0:1, :]                                  # (1, TB)  lambda row

    # lambda_layer, layer 1: Linear(1, HID) + ReLU.
    # K=1 contraction -> pure VPU broadcast multiply-add, no MXU involved.
    h = w1_ref[...] * lam + bstack_ref[0]            # (HID,1)*(1,TB)+(HID,1)
    h = jnp.maximum(h, 0.0)                          # (HID, TB)

    # Layers 2..5: Linear(HID, HID); ReLU after layers 2, 3, 4 only.
    # MXU matmuls with lane-dense N = TB.
    for i in range(4):
        h = jnp.dot(wstack_ref[i], h,
                    preferred_element_type=jnp.float32) + bstack_ref[i + 1]
        if i < 3:
            h = jnp.maximum(h, 0.0)

    # G_layer1: gw1_aug has a zero column for the lambda row, so it can
    # consume the full (42, TB) block: g1 = Gw1 @ f  (no bias).
    g1 = jnp.dot(gw1_ref[...], x,
                 preferred_element_type=jnp.float32)                 # (HID, TB)

    # Elementwise gate, then G_layer2 (no bias).
    gated = h * g1                                                   # (HID, TB)
    out_ref[...] = jnp.dot(gw2_ref[...], gated,
                           preferred_element_type=jnp.float32)       # (N, TB)


def _pick_tile(B, block_cols):
    """Batch tile for the lane dim: multiple of 128 when tiling, and >= 2 grid
    steps when possible so v7x's two TensorCores both get work."""
    block_cols = max(128, (min(block_cols, 64 * 1024) // 128) * 128)
    if B < 256:
        return B  # single full-extent tile for tiny batches
    half = max(128, (((B + 1) // 2) // 128) * 128)
    return min(block_cols, half)


def green_fun_forward_t(x_t, params, block_cols=8192):
    """Feature-major forward.

    x_t: (IN_FEATS, B) f32; row 0 is lambda, rows 1..N are f^T.
    params:
      w1:      (HID, 1)        lambda-layer weight 1 (PyTorch (out,in) layout)
      wstack:  (4, HID, HID)   lambda-layer weights 2..5
      bstack:  (5, HID, 1)     lambda-layer biases 1..5 (columns)
      gw1_aug: (HID, IN_FEATS) G_layer1 weight with a zero column prepended
      gw2:     (N, HID)        G_layer2 weight
    Returns out_t of shape (N, B).
    """
    B = x_t.shape[1]
    tb = _pick_tile(B, block_cols)
    grid = (pl.cdiv(B, tb),)

    # Streamed (double-buffered) per-batch-tile input & output.
    x_spec = pl.BlockSpec((IN_FEATS, tb), lambda i: (0, i))
    out_spec = pl.BlockSpec((N, tb), lambda i: (0, i))

    # Weights: full-extent blocks with constant index_map -> resident in VMEM.
    w1_spec = pl.BlockSpec((HID, 1), lambda i: (0, 0))
    wstack_spec = pl.BlockSpec((4, HID, HID), lambda i: (0, 0, 0))
    bstack_spec = pl.BlockSpec((5, HID, 1), lambda i: (0, 0, 0))
    gw1_spec = pl.BlockSpec((HID, IN_FEATS), lambda i: (0, 0))
    gw2_spec = pl.BlockSpec((N, HID), lambda i: (0, 0))

    # Double-buffered x + out tiles (+ slack for the tiny resident weights).
    vmem_needed = 2 * (IN_FEATS + N) * tb * 4 + (1 << 20)
    cp_kwargs = dict(dimension_semantics=("parallel",))
    if vmem_needed > (16 << 20):                       # exceed v5e default only
        cp_kwargs["vmem_limit_bytes"] = min(int(vmem_needed * 1.25), 48 << 20)

    return pl.pallas_call(
        _green_kernel,
        out_shape=jax.ShapeDtypeStruct((N, B), jnp.float32),
        grid=grid,
        in_specs=[x_spec, w1_spec, wstack_spec, bstack_spec, gw1_spec,
                  gw2_spec],
        out_specs=out_spec,
        compiler_params=pltpu.CompilerParams(**cp_kwargs),
    )(x_t, params["w1"], params["wstack"], params["bstack"],
      params["gw1_aug"], params["gw2"])


def green_fun_forward(lambda_values, f, params, block_cols=8192):
    """Batch-major convenience wrapper: (B,1), (B,N) -> (B,N).
    (For best perf, plumb the feature-major layout from the caller and use
    green_fun_forward_t directly.)"""
    x_t = jnp.concatenate([lambda_values.T, f.T], axis=0)   # (IN_FEATS, B)
    return green_fun_forward_t(x_t, params, block_cols=block_cols).T


def _init_params(key):
    """Deterministic synthetic init matching nn.Linear shapes of GreenFun(N=41),
    in PyTorch-native (out, in) layout, packed for the kernel."""
    ks = jax.random.split(key, 12)

    def lin(k, fan_out, fan_in):
        bound = 1.0 / (fan_in ** 0.5)
        return jax.random.uniform(k, (fan_out, fan_in), jnp.float32,
                                  minval=-bound, maxval=bound)

    w1 = lin(ks[0], HID, 1)
    w2 = lin(ks[2], HID, HID)
    w3 = lin(ks[4], HID, HID)
    w4 = lin(ks[6], HID, HID)
    w5 = lin(ks[8], HID, HID)
    b1 = jax.random.normal(ks[1], (HID, 1)) * 0.1
    b2 = jax.random.normal(ks[3], (HID, 1)) * 0.1
    b3 = jax.random.normal(ks[5], (HID, 1)) * 0.1
    b4 = jax.random.normal(ks[7], (HID, 1)) * 0.1
    b5 = jax.random.normal(ks[9], (HID, 1)) * 0.1

    gw1 = lin(ks[10], HID, N)       # G_layer1: Linear(N, N//4, bias=False)
    gw2 = lin(ks[11], N, HID)       # G_layer2: Linear(N//4, N, bias=False)
    gw1_aug = jnp.concatenate(      # zero column for the lambda row of x
        [jnp.zeros((HID, 1), jnp.float32), gw1], axis=1)     # (HID, 42)

    p = {
        "w1": w1,
        "wstack": jnp.stack([w2, w3, w4, w5], axis=0),        # (4, HID, HID)
        "bstack": jnp.stack([b1, b2, b3, b4, b5], axis=0),    # (5, HID, 1)
        "gw1_aug": gw1_aug,
        "gw2": gw2,
    }
    return {k: v.astype(jnp.float32) for k, v in p.items()}


def _reference(lambda_values, f, p):
    """Pure-JAX batch-major reference matching the PyTorch module."""
    h = lambda_values @ p["w1"].T + p["bstack"][0].T
    h = jnp.maximum(h, 0.0)
    for i in range(4):
        h = h @ p["wstack"][i].T + p["bstack"][i + 1].T
        if i < 3:
            h = jnp.maximum(h, 0.0)
    g1 = f @ p["gw1_aug"][:, 1:].T
    return (h * g1) @ p["gw2"].T


if __name__ == "__main__":
    key = jax.random.PRNGKey(0)
    k_lam, k_f, k_par = jax.random.split(key, 3)

    B = 256
    lambda_values = jax.random.normal(k_lam, (B, 1), jnp.float32)
    f = jax.random.normal(k_f, (B, N), jnp.float32)
    params = _init_params(k_par)

    # B=256 -> tile 128 -> grid of 2 batch tiles: exercises the pipelined path
    # and the megacore ("parallel") sharding.
    out = green_fun_forward(lambda_values, f, params)
    out = jax.block_until_ready(out)

    ref = _reference(lambda_values, f, params)
    assert out.shape == (B, N)
    assert jnp.allclose(out, ref, atol=1e-4, rtol=1e-4), "mismatch vs reference"

    print("KERNEL_OK")
</pallas_src>

<mosaic_0001>
module attributes {stable_mosaic.version = 11 : i64} {
  func.func @_green_kernel(%arg0: i32, %arg1: memref<42x128xf32, #tpu.memory_space<vmem>>, %arg2: memref<10x1xf32, #tpu.memory_space<vmem>>, %arg3: memref<4x10x10xf32, #tpu.memory_space<vmem>>, %arg4: memref<5x10x1xf32, #tpu.memory_space<vmem>>, %arg5: memref<10x42xf32, #tpu.memory_space<vmem>>, %arg6: memref<41x10xf32, #tpu.memory_space<vmem>>, %arg7: memref<41x128xf32, #tpu.memory_space<vmem>>) attributes {dimension_semantics = [#tpu.dimension_semantics<parallel>], iteration_bounds = array<i64: 2>, scalar_prefetch = 0 : i64, scratch_operands = 0 : i64, tpu.core_type = #tpu.core_type<tc>, window_params = [{transform_indices = @transform_0, window_bounds = array<i64: 42, 128>}, {pipeline_mode = #tpu.pipeline_mode<synchronous>, transform_indices = @transform_1, window_bounds = array<i64: 10, 1>}, {pipeline_mode = #tpu.pipeline_mode<synchronous>, transform_indices = @transform_2, window_bounds = array<i64: 4, 10, 10>}, {pipeline_mode = #tpu.pipeline_mode<synchronous>, transform_indices = @transform_3, window_bounds = array<i64: 5, 10, 1>}, {pipeline_mode = #tpu.pipeline_mode<synchronous>, transform_indices = @transform_4, window_bounds = array<i64: 10, 42>}, {pipeline_mode = #tpu.pipeline_mode<synchronous>, transform_indices = @transform_5, window_bounds = array<i64: 41, 10>}, {transform_indices = @transform_6, window_bounds = array<i64: 41, 128>}]} {
    %c0 = arith.constant 0 : index
    %c0_0 = arith.constant 0 : index
    %0 = vector.load %arg1[%c0, %c0_0] : memref<42x128xf32, #tpu.memory_space<vmem>>, vector<42x128xf32>
    %1 = vector.extract_strided_slice %0 {offsets = [0, 0], sizes = [1, 128], strides = [1, 1]} : vector<42x128xf32> to vector<1x128xf32>
    %c0_1 = arith.constant 0 : index
    %c0_2 = arith.constant 0 : index
    %2 = vector.load %arg2[%c0_1, %c0_2] : memref<10x1xf32, #tpu.memory_space<vmem>>, vector<10x1xf32>
    %3 = vector.broadcast %2 : vector<10x1xf32> to vector<10x128xf32>
    %4 = vector.broadcast %1 : vector<1x128xf32> to vector<10x128xf32>
    %5 = arith.mulf %3, %4 : vector<10x128xf32>
    %c0_3 = arith.constant 0 : index
    %c0_4 = arith.constant 0 : index
    %c0_5 = arith.constant 0 : index
    %6 = vector.load %arg4[%c0_3, %c0_4, %c0_5] : memref<5x10x1xf32, #tpu.memory_space<vmem>>, vector<1x10x1xf32>
    %7 = vector.shape_cast %6 : vector<1x10x1xf32> to vector<10x1xf32>
    %8 = vector.broadcast %7 : vector<10x1xf32> to vector<10x128xf32>
    %9 = arith.addf %5, %8 : vector<10x128xf32>
    %cst = arith.constant 0.000000e+00 : f32
    %10 = vector.broadcast %cst : f32 to vector<10x128xf32>
    %11 = arith.maximumf %9, %10 : vector<10x128xf32>
    %c0_6 = arith.constant 0 : index
    %c0_7 = arith.constant 0 : index
    %c0_8 = arith.constant 0 : index
    %12 = vector.load %arg3[%c0_6, %c0_7, %c0_8] : memref<4x10x10xf32, #tpu.memory_space<vmem>>, vector<1x10x10xf32>
    %13 = vector.shape_cast %12 : vector<1x10x10xf32> to vector<10x10xf32>
    %cst_9 = arith.constant dense<0.000000e+00> : vector<10x128xf32>
    %14 = tpu.matmul %13, %11, %cst_9 {dimension_numbers = #tpu.dot_dimension_numbers<[1], [0], [0], [1], [0, 0, 1, 1], [], []>} : vector<10x10xf32>, vector<10x128xf32>, vector<10x128xf32> -> vector<10x128xf32>
    %c1 = arith.constant 1 : index
    %c0_10 = arith.constant 0 : index
    %c0_11 = arith.constant 0 : index
    %15 = vector.load %arg4[%c1, %c0_10, %c0_11] : memref<5x10x1xf32, #tpu.memory_space<vmem>>, vector<1x10x1xf32>
    %16 = vector.shape_cast %15 : vector<1x10x1xf32> to vector<10x1xf32>
    %17 = vector.broadcast %16 : vector<10x1xf32> to vector<10x128xf32>
    %18 = arith.addf %14, %17 : vector<10x128xf32>
    %cst_12 = arith.constant 0.000000e+00 : f32
    %19 = vector.broadcast %cst_12 : f32 to vector<10x128xf32>
    %20 = arith.maximumf %18, %19 : vector<10x128xf32>
    %c1_13 = arith.constant 1 : index
    %c0_14 = arith.constant 0 : index
    %c0_15 = arith.constant 0 : index
    %21 = vector.load %arg3[%c1_13, %c0_14, %c0_15] : memref<4x10x10xf32, #tpu.memory_space<vmem>>, vector<1x10x10xf32>
    %22 = vector.shape_cast %21 : vector<1x10x10xf32> to vector<10x10xf32>
    %cst_16 = arith.constant dense<0.000000e+00> : vector<10x128xf32>
    %23 = tpu.matmul %22, %20, %cst_16 {dimension_numbers = #tpu.dot_dimension_numbers<[1], [0], [0], [1], [0, 0, 1, 1], [], []>} : vector<10x10xf32>, vector<10x128xf32>, vector<10x128xf32> -> vector<10x128xf32>
    %c2 = arith.constant 2 : index
    %c0_17 = arith.constant 0 : index
    %c0_18 = arith.constant 0 : index
    %24 = vector.load %arg4[%c2, %c0_17, %c0_18] : memref<5x10x1xf32, #tpu.memory_space<vmem>>, vector<1x10x1xf32>
    %25 = vector.shape_cast %24 : vector<1x10x1xf32> to vector<10x1xf32>
    %26 = vector.broadcast %25 : vector<10x1xf32> to vector<10x128xf32>
    %27 = arith.addf %23, %26 : vector<10x128xf32>
    %cst_19 = arith.constant 0.000000e+00 : f32
    %28 = vector.broadcast %cst_19 : f32 to vector<10x128xf32>
    %29 = arith.maximumf %27, %28 : vector<10x128xf32>
    %c2_20 = arith.constant 2 : index
    %c0_21 = arith.constant 0 : index
    %c0_22 = arith.constant 0 : index
    %30 = vector.load %arg3[%c2_20, %c0_21, %c0_22] : memref<4x10x10xf32, #tpu.memory_space<vmem>>, vector<1x10x10xf32>
    %31 = vector.shape_cast %30 : vector<1x10x10xf32> to vector<10x10xf32>
    %cst_23 = arith.constant dense<0.000000e+00> : vector<10x128xf32>
    %32 = tpu.matmul %31, %29, %cst_23 {dimension_numbers = #tpu.dot_dimension_numbers<[1], [0], [0], [1], [0, 0, 1, 1], [], []>} : vector<10x10xf32>, vector<10x128xf32>, vector<10x128xf32> -> vector<10x128xf32>
    %c3 = arith.constant 3 : index
    %c0_24 = arith.constant 0 : index
    %c0_25 = arith.constant 0 : index
    %33 = vector.load %arg4[%c3, %c0_24, %c0_25] : memref<5x10x1xf32, #tpu.memory_space<vmem>>, vector<1x10x1xf32>
    %34 = vector.shape_cast %33 : vector<1x10x1xf32> to vector<10x1xf32>
    %35 = vector.broadcast %34 : vector<10x1xf32> to vector<10x128xf32>
    %36 = arith.addf %32, %35 : vector<10x128xf32>
    %cst_26 = arith.constant 0.000000e+00 : f32
    %37 = vector.broadcast %cst_26 : f32 to vector<10x128xf32>
    %38 = arith.maximumf %36, %37 : vector<10x128xf32>
    %c3_27 = arith.constant 3 : index
    %c0_28 = arith.constant 0 : index
    %c0_29 = arith.constant 0 : index
    %39 = vector.load %arg3[%c3_27, %c0_28, %c0_29] : memref<4x10x10xf32, #tpu.memory_space<vmem>>, vector<1x10x10xf32>
    %40 = vector.shape_cast %39 : vector<1x10x10xf32> to vector<10x10xf32>
    %cst_30 = arith.constant dense<0.000000e+00> : vector<10x128xf32>
    %41 = tpu.matmul %40, %38, %cst_30 {dimension_numbers = #tpu.dot_dimension_numbers<[1], [0], [0], [1], [0, 0, 1, 1], [], []>} : vector<10x10xf32>, vector<10x128xf32>, vector<10x128xf32> -> vector<10x128xf32>
    %c4 = arith.constant 4 : index
    %c0_31 = arith.constant 0 : index
    %c0_32 = arith.constant 0 : index
    %42 = vector.load %arg4[%c4, %c0_31, %c0_32] : memref<5x10x1xf32, #tpu.memory_space<vmem>>, vector<1x10x1xf32>
    %43 = vector.shape_cast %42 : vector<1x10x1xf32> to vector<10x1xf32>
    %44 = vector.broadcast %43 : vector<10x1xf32> to vector<10x128xf32>
    %45 = arith.addf %41, %44 : vector<10x128xf32>
    %c0_33 = arith.constant 0 : index
    %c0_34 = arith.constant 0 : index
    %46 = vector.load %arg5[%c0_33, %c0_34] : memref<10x42xf32, #tpu.memory_space<vmem>>, vector<10x42xf32>
    %cst_35 = arith.constant dense<0.000000e+00> : vector<10x128xf32>
    %47 = tpu.matmul %46, %0, %cst_35 {dimension_numbers = #tpu.dot_dimension_numbers<[1], [0], [0], [1], [0, 0, 1, 1], [], []>} : vector<10x42xf32>, vector<42x128xf32>, vector<10x128xf32> -> vector<10x128xf32>
    %48 = arith.mulf %45, %47 : vector<10x128xf32>
    %c0_36 = arith.constant 0 : index
    %c0_37 = arith.constant 0 : index
    %49 = vector.load %arg6[%c0_36, %c0_37] : memref<41x10xf32, #tpu.memory_space<vmem>>, vector<41x10xf32>
    %cst_38 = arith.constant dense<0.000000e+00> : vector<41x128xf32>
    %50 = tpu.matmul %49, %48, %cst_38 {dimension_numbers = #tpu.dot_dimension_numbers<[1], [0], [0], [1], [0, 0, 1, 1], [], []>} : vector<41x10xf32>, vector<10x128xf32>, vector<41x128xf32> -> vector<41x128xf32>
    %c0_39 = arith.constant 0 : index
    %c0_40 = arith.constant 0 : index
    %51 = vector.load %arg7[%c0_39, %c0_40] : memref<41x128xf32, #tpu.memory_space<vmem>>, vector<41x128xf32>
    tpu.vector_store %arg7[%c0_39, %c0_40], %50 {strides = array<i32>} : memref<41x128xf32, #tpu.memory_space<vmem>>, vector<41x128xf32>,
    return
  }
  func.func @transform_0(%arg0: i32) -> (i32, i32) {
    %c0_i32 = arith.constant 0 : i32
    %c0_i32_0 = arith.constant 0 : i32
    return %c0_i32, %arg0 : i32, i32
  }
  func.func @transform_1(%arg0: i32) -> (i32, i32) {
    %c0_i32 = arith.constant 0 : i32
    %c0_i32_0 = arith.constant 0 : i32
    %c0_i32_1 = arith.constant 0 : i32
    return %c0_i32, %c0_i32_0 : i32, i32
  }
  func.func @transform_2(%arg0: i32) -> (i32, i32, i32) {
    %c0_i32 = arith.constant 0 : i32
    %c0_i32_0 = arith.constant 0 : i32
    %c0_i32_1 = arith.constant 0 : i32
    %c0_i32_2 = arith.constant 0 : i32
    return %c0_i32, %c0_i32_0, %c0_i32_1 : i32, i32, i32
  }
  func.func @transform_3(%arg0: i32) -> (i32, i32, i32) {
    %c0_i32 = arith.constant 0 : i32
    %c0_i32_0 = arith.constant 0 : i32
    %c0_i32_1 = arith.constant 0 : i32
    %c0_i32_2 = arith.constant 0 : i32
    return %c0_i32, %c0_i32_0, %c0_i32_1 : i32, i32, i32
  }
  func.func @transform_4(%arg0: i32) -> (i32, i32) {
    %c0_i32 = arith.constant 0 : i32
    %c0_i32_0 = arith.constant 0 : i32
    %c0_i32_1 = arith.constant 0 : i32
    return %c0_i32, %c0_i32_0 : i32, i32
  }
  func.func @transform_5(%arg0: i32) -> (i32, i32) {
    %c0_i32 = arith.constant 0 : i32
    %c0_i32_0 = arith.constant 0 : i32
    %c0_i32_1 = arith.constant 0 : i32
    return %c0_i32, %c0_i32_0 : i32, i32
  }
  func.func @transform_6(%arg0: i32) -> (i32, i32) {
    %c0_i32 = arith.constant 0 : i32
    %c0_i32_0 = arith.constant 0 : i32
    return %c0_i32, %arg0 : i32, i32
  }
}

</mosaic_0001>

<llo_original>
// kernel: tpu_custom_call.1
$region0: #{tpu_custom_call.1}
  #allocation0 [shape = 'u32[]', space=smem, size = 0x4, offset = 0x4, fixed_abs, tag = 'smem constant byte address 0x4 - core index']
  #allocation1 [shape = 'u32[144,128]{1,0:T(1,128)}', space=vmem, size = 0x12000, scoped, tag = 'internal scratch']
  %s0 = inlined_call_operand.vmem [shape: f32[42,256], index: 0, kind: input, shape index: {}]
  %s1 = inlined_call_operand.vmem [shape: f32[10,1], index: 1, kind: input, shape index: {}]
  %s2 = inlined_call_operand.vmem [shape: f32[4,10,10], index: 2, kind: input, shape index: {}]
  %s3 = inlined_call_operand.vmem [shape: f32[5,10,1], index: 3, kind: input, shape index: {}]
  %s4 = inlined_call_operand.vmem [shape: f32[10,42], index: 4, kind: input, shape index: {}]
  %s5 = inlined_call_operand.vmem [shape: f32[41,10], index: 5, kind: input, shape index: {}]
  %s6 = inlined_call_operand.hbm [shape: f32[41,256], index: 6, kind: output, shape index: {}]
  %s7 = sld [smem:[#allocation0]]
  $region95: #{tpu_custom_call.1} parent=0
    _
  %s9 = ssub.s32 1, %s7
  %s10 = scalar_select 0, %s9, %s7
  $region1: #{tpu_custom_call.1} parent=0
    #allocation2 [shape = 'u8[49152]{0}', space=vmem, size = 0xc000, scoped, tag = 'input window, operand 0']
    #allocation3 [shape = 'u8[49152]{0}', space=vmem, size = 0xc000, scoped, tag = 'output window, operand 0']
    #allocation4 [shape = 's32[2]{0}', space=sflag, size = 0x8, scoped, tag = 'scoped memory for tpu_custom_call.1']
    %11 = vsyncpa [#allocation4], 0
    %s12 = scalar_lea.sflag [#allocation4], 1
    %13 = vsyncpa %s12, 0
    loop: start=0, step=1, limit=4
    $region2: #{tpu_custom_call.1} parent=1 // loop_pre_header
      _
    $region3: #{tpu_custom_call.1} parent=1 // loop_header
      %s15 = sphi 0, %s19
      %p16 = scmp.ge.s32.totalorder %s15, 4
      %s25 = sphi 0, %s27
      %s28 = sphi 0, %s25
      %s29 = sphi 0, %s28
      %s45 = sphi 0, %s29
      %s49 = sphi 0, %s49
      %s51 = sphi 0, %s49
      %s52 = sphi 0, %s51
      %s66 = sphi 0, %s52
      %s70 = sphi 0, %s70
      %s72 = sphi 0, %s70
      %s73 = sphi 0, %s72
      %s87 = sphi 0, %s73
      %s91 = sphi 0, %s91
      %s93 = sphi 0, %s91
      %s94 = sphi 0, %s93
      %s108 = sphi 0, %s94
      %s112 = sphi 0, %s112
      %s114 = sphi 0, %s112
      %s115 = sphi 0, %s114
      %s129 = sphi 0, %s115
      %s133 = sphi 0, %s133
      %s135 = sphi 0, %s133
      %s136 = sphi 0, %s135
      %s150 = sphi 0, %s136
      %s156 = sphi 0, %s158
      %s159 = sphi 0, %s156
      %s160 = sphi 0, %s159
      %s176 = sphi 0, %s160
    $region4: #{tpu_custom_call.1} parent=1 // loop_header_branch
      %18 = sbr.rel (%p16) target = $region8
    $region5: #{tpu_custom_call.1} parent=1 // loop_body
      %s20 = ssub.s32 %s15, 1
      %s21 = ssub.s32 %s15, 2
      %s22 = sadd.s32 %s15, 1
      %s23 = ssub.s32 %s15, %s22
      %p24 = scmp.eq.s32.totalorder %s23, 0
      %s26 = sadd.s32 %s25, 1
      %s27 = scalar_select %p24, %s25, %s26
      %p30 = pneg %p24
      %p31 = scmp.eq.s32.totalorder %s15, 1
      %p32 = por %p30, %p31
      %p33 = scmp.ne.s32.totalorder %s25, %s28
      %p34 = scmp.eq.s32.totalorder %s15, 0
      %p35 = por %p33, %p34
      %p36 = scmp.ne.s32.totalorder %s25, %s28
      %p37 = scmp.eq.s32.totalorder %s20, 1
      %p38 = por %p36, %p37
      %p39 = scmp.ne.s32.totalorder %s28, %s29
      %p40 = scmp.eq.s32.totalorder %s20, 0
      %p41 = por %p39, %p40
      %p42 = scmp.ne.s32.totalorder %s28, %s29
      %p43 = scmp.eq.s32.totalorder %s21, 1
      %p44 = por %p42, %p43
      %p46 = scmp.ne.s32.totalorder %s29, %s45
      %p47 = scmp.eq.s32.totalorder %s21, 0
      %p48 = por %p46, %p47
      %s50 = sadd.s32 %s49, 1
      %p53 = scmp.eq.s32.totalorder %s15, 1
      %p54 = scmp.ne.s32.totalorder %s49, %s51
      %p55 = scmp.eq.s32.totalorder %s15, 0
      %p56 = por %p54, %p55
      %p57 = scmp.ne.s32.totalorder %s49, %s51
      %p58 = scmp.eq.s32.totalorder %s20, 1
      %p59 = por %p57, %p58
      %p60 = scmp.ne.s32.totalorder %s51, %s52
      %p61 = scmp.eq.s32.totalorder %s20, 0
      %p62 = por %p60, %p61
      %p63 = scmp.ne.s32.totalorder %s51, %s52
      %p64 = scmp.eq.s32.totalorder %s21, 1
      %p65 = por %p63, %p64
      %p67 = scmp.ne.s32.totalorder %s52, %s66
      %p68 = scmp.eq.s32.totalorder %s21, 0
      %p69 = por %p67, %p68
      %s71 = sadd.s32 %s70, 1
      %p74 = scmp.eq.s32.totalorder %s15, 1
      %p75 = scmp.ne.s32.totalorder %s70, %s72
      %p76 = scmp.eq.s32.totalorder %s15, 0
      %p77 = por %p75, %p76
      %p78 = scmp.ne.s32.totalorder %s70, %s72
      %p79 = scmp.eq.s32.totalorder %s20, 1
      %p80 = por %p78, %p79
      %p81 = scmp.ne.s32.totalorder %s72, %s73
      %p82 = scmp.eq.s32.totalorder %s20, 0
      %p83 = por %p81, %p82
      %p84 = scmp.ne.s32.totalorder %s72, %s73
      %p85 = scmp.eq.s32.totalorder %s21, 1
      %p86 = por %p84, %p85
      %p88 = scmp.ne.s32.totalorder %s73, %s87
      %p89 = scmp.eq.s32.totalorder %s21, 0
      %p90 = por %p88, %p89
      %s92 = sadd.s32 %s91, 1
      %p95 = scmp.eq.s32.totalorder %s15, 1
      %p96 = scmp.ne.s32.totalorder %s91, %s93
      %p97 = scmp.eq.s32.totalorder %s15, 0
      %p98 = por %p96, %p97
      %p99 = scmp.ne.s32.totalorder %s91, %s93
      %p100 = scmp.eq.s32.totalorder %s20, 1
      %p101 = por %p99, %p100
      %p102 = scmp.ne.s32.totalorder %s93, %s94
      %p103 = scmp.eq.s32.totalorder %s20, 0
      %p104 = por %p102, %p103
      %p105 = scmp.ne.s32.totalorder %s93, %s94
      %p106 = scmp.eq.s32.totalorder %s21, 1
      %p107 = por %p105, %p106
      %p109 = scmp.ne.s32.totalorder %s94, %s108
      %p110 = scmp.eq.s32.totalorder %s21, 0
      %p111 = por %p109, %p110
      %s113 = sadd.s32 %s112, 1
      %p116 = scmp.eq.s32.totalorder %s15, 1
      %p117 = scmp.ne.s32.totalorder %s112, %s114
      %p118 = scmp.eq.s32.totalorder %s15, 0
      %p119 = por %p117, %p118
      %p120 = scmp.ne.s32.totalorder %s112, %s114
      %p121 = scmp.eq.s32.totalorder %s20, 1
      %p122 = por %p120, %p121
      %p123 = scmp.ne.s32.totalorder %s114, %s115
      %p124 = scmp.eq.s32.totalorder %s20, 0
      %p125 = por %p123, %p124
      %p126 = scmp.ne.s32.totalorder %s114, %s115
      %p127 = scmp.eq.s32.totalorder %s21, 1
      %p128 = por %p126, %p127
      %p130 = scmp.ne.s32.totalorder %s115, %s129
      %p131 = scmp.eq.s32.totalorder %s21, 0
      %p132 = por %p130, %p131
      %s134 = sadd.s32 %s133, 1
      %p137 = scmp.eq.s32.totalorder %s15, 1
      %p138 = scmp.ne.s32.totalorder %s133, %s135
      %p139 = scmp.eq.s32.totalorder %s15, 0
      %p140 = por %p138, %p139
      %p141 = scmp.ne.s32.totalorder %s133, %s135
      %p142 = scmp.eq.s32.totalorder %s20, 1
      %p143 = por %p141, %p142
      %p144 = scmp.ne.s32.totalorder %s135, %s136
      %p145 = scmp.eq.s32.totalorder %s20, 0
      %p146 = por %p144, %p145
      %p147 = scmp.ne.s32.totalorder %s135, %s136
      %p148 = scmp.eq.s32.totalorder %s21, 1
      %p149 = por %p147, %p148
      %p151 = scmp.ne.s32.totalorder %s136, %s150
      %p152 = scmp.eq.s32.totalorder %s21, 0
      %p153 = por %p151, %p152
      %s154 = ssub.s32 %s15, %s22
      %p155 = scmp.eq.s32.totalorder %s154, 0
      %s157 = sadd.s32 %s156, 1
      %s158 = scalar_select %p155, %s156, %s157
      %p161 = pneg %p155
      %p162 = scmp.eq.s32.totalorder %s15, 1
      %p163 = por %p161, %p162
      %p164 = scmp.ne.s32.totalorder %s156, %s159
      %p165 = scmp.eq.s32.totalorder %s15, 0
      %p166 = por %p164, %p165
      %p167 = scmp.ne.s32.totalorder %s156, %s159
      %p168 = scmp.eq.s32.totalorder %s20, 1
      %p169 = por %p167, %p168
      %p170 = scmp.ne.s32.totalorder %s159, %s160
      %p171 = scmp.eq.s32.totalorder %s20, 0
      %p172 = por %p170, %p171
      %p173 = scmp.ne.s32.totalorder %s159, %s160
      %p174 = scmp.eq.s32.totalorder %s21, 1
      %p175 = por %p173, %p174
      %p177 = scmp.ne.s32.totalorder %s160, %s176
      %p178 = scmp.eq.s32.totalorder %s21, 0
      %p179 = por %p177, %p178
      %p180 = scmp.le.s32.totalorder 1, %s15
      %p181 = scmp.lt.s32.totalorder %s15, 3
      %p182 = pnand %p180, %p181
      %p183 = pneg %p182
      // Predicated region
      $region9: #{tpu_custom_call.1} parent=5 // pred_check
        _
      $region10: #{tpu_custom_call.1} parent=5 // pred_check_branch
        %185 = sbr.rel (%p182) target = $region12
      $region11: #{tpu_custom_call.1} parent=5 // pred_region
        %s186 = ssub.s32 %s15, 1
        // Predicated region
        $region13: #{tpu_custom_call.1} parent=11 // pred_check
          %p187 = pneg %p62
        $region14: #{tpu_custom_call.1} parent=11 // pred_check_branch
          %189 = sbr.rel (%p187) target = $region16
        $region15: #{tpu_custom_call.1} parent=11 // pred_region
          _
        $region16: #{tpu_custom_call.1} parent=11 // pred_fallthru
          _
        // Predicated region
        $region17: #{tpu_custom_call.1} parent=11 // pred_check
          %p190 = pneg %p83
        $region18: #{tpu_custom_call.1} parent=11 // pred_check_branch
          %192 = sbr.rel (%p190) target = $region20
        $region19: #{tpu_custom_call.1} parent=11 // pred_region
          _
        $region20: #{tpu_custom_call.1} parent=11 // pred_fallthru
          _
        // Predicated region
        $region21: #{tpu_custom_call.1} parent=11 // pred_check
          %p193 = pneg %p104
        $region22: #{tpu_custom_call.1} parent=11 // pred_check_branch
          %195 = sbr.rel (%p193) target = $region24
        $region23: #{tpu_custom_call.1} parent=11 // pred_region
          _
        $region24: #{tpu_custom_call.1} parent=11 // pred_fallthru
          _
        // Predicated region
        $region25: #{tpu_custom_call.1} parent=11 // pred_check
          %p196 = pneg %p125
        $region26: #{tpu_custom_call.1} parent=11 // pred_check_branch
          %198 = sbr.rel (%p196) target = $region28
        $region27: #{tpu_custom_call.1} parent=11 // pred_region
          _
        $region28: #{tpu_custom_call.1} parent=11 // pred_fallthru
          _
        // Predicated region
        $region29: #{tpu_custom_call.1} parent=11 // pred_check
          %p199 = pneg %p146
        $region30: #{tpu_custom_call.1} parent=11 // pred_check_branch
          %201 = sbr.rel (%p199) target = $region32
        $region31: #{tpu_custom_call.1} parent=11 // pred_region
          _
        $region32: #{tpu_custom_call.1} parent=11 // pred_fallthru
          _
      $region12: #{tpu_custom_call.1} parent=5 // pred_fallthru
        _
      %p202 = scmp.lt.s32.totalorder %s15, 2
      // Predicated region
      $region33: #{tpu_custom_call.1} parent=5 // pred_check
        %p203 = pneg %p202
      $region34: #{tpu_custom_call.1} parent=5 // pred_check_branch
        %205 = sbr.rel (%p203) target = $region36
      $region35: #{tpu_custom_call.1} parent=5 // pred_region
        // Predicated region
        $region37: #{tpu_custom_call.1} parent=35 // pred_check
          %p206 = pneg %p35
        $region38: #{tpu_custom_call.1} parent=35 // pred_check_branch
          %208 = sbr.rel (%p206) target = $region40
        $region39: #{tpu_custom_call.1} parent=35 // pred_region
          %s209 = sand.u32 %s25, 1
          %s210 = sand.u32 %s25, 1
          %s211 = smul.addr %s210, 48
          %s212 = scalar_lea.vmem [#allocation2], %s211
          %s213 = smul.addr %s15, 8
          %s214 = scalar_lea.vmem %s0, %s213
          // Predicated region
          $region41: #{tpu_custom_call.1} parent=39 // pred_check
            _
          $region42: #{tpu_custom_call.1} parent=39 // pred_check_branch
            %216 = sbr.rel (0) target = $region44
          $region43: #{tpu_custom_call.1} parent=39 // pred_region
            // Predicated region
            $region45: #{tpu_custom_call.1} parent=43 // pred_check
              _
            $region46: #{tpu_custom_call.1} parent=43 // pred_check_branch
              %218 = sbr.rel (0) target = $region48
            $region47: #{tpu_custom_call.1} parent=43 // pred_region
              // Predicated region
              $region60: #{tpu_custom_call.1} parent=47 // pred_check
                _
              $region61: #{tpu_custom_call.1} parent=47 // pred_check_branch
                %243 = sbr.rel (0) target = $region63
              $region62: #{tpu_custom_call.1} parent=47 // pred_region
                loop: start=0, step=1, limit=1
                $region64: #{tpu_custom_call.1} parent=62 // loop_pre_header
                  _
                $region65: #{tpu_custom_call.1} parent=62 // loop_header
                  %s245 = sphi 0, %s249
                  %p246 = scmp.ge.s32.totalorder %s245, 1
                  %s250 = sphi %s214, %s214
                  %s251 = sphi %s212, %s212
                $region66: #{tpu_custom_call.1} parent=62 // loop_header_branch
                  %248 = sbr.rel (%p246) target = $region70
                $region67: #{tpu_custom_call.1} parent=62 // loop_body
                  %v252 = vld [vmem:[%s250] sm:$0xff]
                  %253 = vst [vmem:[%s251] sm:$0xff] %v252
                  %v254 = vld [vmem:[%s250 + $0x10] sm:$0xff]
                  %255 = vst [vmem:[%s251 + $0x8] sm:$0xff] %v254
                  %v256 = vld [vmem:[%s250 + $0x20] sm:$0xff]
                  %257 = vst [vmem:[%s251 + $0x10] sm:$0xff] %v256
                  %v258 = vld [vmem:[%s250 + $0x30] sm:$0xff]
                  %259 = vst [vmem:[%s251 + $0x18] sm:$0xff] %v258
                  %v260 = vld [vmem:[%s250 + $0x40] sm:$0xff]
                  %261 = vst [vmem:[%s251 + $0x20] sm:$0xff] %v260
                  %v262 = vld [vmem:[%s250 + $0x50] sm:$0xff]
                  %263 = vst [vmem:[%s251 + $0x28] sm:$0xff] %v262
                $region68: #{tpu_custom_call.1} parent=62 // loop_footer
                  %s249 = sadd.s32 1, %s245
                $region69: #{tpu_custom_call.1} parent=62 // loop_footer_branch
                  %244 = sbr.rel target = $region65
                $region70: #{tpu_custom_call.1} parent=62 // loop_exit
                  _
              $region63: #{tpu_custom_call.1} parent=47 // pred_fallthru
                _
              // Predicated region
              $region71: #{tpu_custom_call.1} parent=47 // pred_check
                _
              $region72: #{tpu_custom_call.1} parent=47 // pred_check_branch
                %265 = sbr.rel target = $region74
              $region73: #{tpu_custom_call.1} parent=47 // pred_region
                _
              $region74: #{tpu_custom_call.1} parent=47 // pred_fallthru
                _
            $region48: #{tpu_custom_call.1} parent=43 // pred_fallthru
              _
            // Predicated region
            $region49: #{tpu_custom_call.1} parent=43 // pred_check
              _
            $region50: #{tpu_custom_call.1} parent=43 // pred_check_branch
              %220 = sbr.rel target = $region52
            $region51: #{tpu_custom_call.1} parent=43 // pred_region
              loop: start=0, step=1, limit=1
              $region53: #{tpu_custom_call.1} parent=51 // loop_pre_header
                _
              $region54: #{tpu_custom_call.1} parent=51 // loop_header
                %s223 = sphi 0, %s227
                %p224 = scmp.ge.s32.totalorder %s223, 1
                %s228 = sphi %s214, %s214
                %s229 = sphi %s212, %s212
              $region55: #{tpu_custom_call.1} parent=51 // loop_header_branch
                %226 = sbr.rel (%p224) target = $region59
              $region56: #{tpu_custom_call.1} parent=51 // loop_body
                %v230 = vld [vmem:[%s228] sm:$0xff]
                %231 = vst [vmem:[%s229] sm:$0xff] %v230
                %v232 = vld [vmem:[%s228 + $0x10] sm:$0xff]
                %233 = vst [vmem:[%s229 + $0x8] sm:$0xff] %v232
                %v234 = vld [vmem:[%s228 + $0x20] sm:$0xff]
                %235 = vst [vmem:[%s229 + $0x10] sm:$0xff] %v234
                %v236 = vld [vmem:[%s228 + $0x30] sm:$0xff]
                %237 = vst [vmem:[%s229 + $0x18] sm:$0xff] %v236
                %v238 = vld [vmem:[%s228 + $0x40] sm:$0xff]
                %239 = vst [vmem:[%s229 + $0x20] sm:$0xff] %v238
                %v240 = vld [vmem:[%s228 + $0x50] sm:$0xff]
                %241 = vst [vmem:[%s229 + $0x28] sm:$0xff] %v240
              $region57: #{tpu_custom_call.1} parent=51 // loop_footer
                %s227 = sadd.s32 1, %s223
              $region58: #{tpu_custom_call.1} parent=51 // loop_footer_branch
                %222 = sbr.rel target = $region54
              $region59: #{tpu_custom_call.1} parent=51 // loop_exit
                _
            $region52: #{tpu_custom_call.1} parent=43 // pred_fallthru
              _
          $region44: #{tpu_custom_call.1} parent=39 // pred_fallthru
            _
          %266 = vnop
        $region40: #{tpu_custom_call.1} parent=35 // pred_fallthru
          _
      $region36: #{tpu_custom_call.1} parent=5 // pred_fallthru
        _
      %p267 = scmp.le.s32.totalorder 1, %s15
      %p268 = scmp.lt.s32.totalorder %s15, 3
      %p269 = pnand %p267, %p268
      %p270 = pneg %p269
      // Predicated region
      $region75: #{tpu_custom_call.1} parent=5 // pred_check
        _
      $region76: #{tpu_custom_call.1} parent=5 // pred_check_branch
        %272 = sbr.rel (%p269) target = $region78
      $region77: #{tpu_custom_call.1} parent=5 // pred_region
        %s273 = ssub.s32 %s15, 1
        %s274 = sand.u32 %s28, 1
        %s275 = sand.u32 %s28, 1
        %s276 = smul.addr %s275, 48
        %s277 = scalar_lea.vmem [#allocation2], %s276
        // Predicated region
        $region79: #{tpu_custom_call.1} parent=77 // pred_check
          %p278 = pneg %p41
        $region80: #{tpu_custom_call.1} parent=77 // pred_check_branch
          %280 = sbr.rel (%p278) target = $region82
        $region81: #{tpu_custom_call.1} parent=77 // pred_region
          _
        $region82: #{tpu_custom_call.1} parent=77 // pred_fallthru
          _
        %s281 = sand.u32 %s28, 1
        %s282 = sand.u32 %s28, 1
        %s283 = smul.addr %s282, 48
        %s284 = scalar_lea.vmem [#allocation2], %s283
        %p285 = pneg %p41
        %p286 = pneg %p38
        %p287 = pneg %p62
        %p288 = pneg %p59
        %p289 = pneg %p83
        %p290 = pneg %p80
        %p291 = pneg %p104
        %p292 = pneg %p101
        %p293 = pneg %p125
        %p294 = pneg %p122
        %p295 = pneg %p146
        %p296 = pneg %p143
        %p297 = pneg %p172
        %p298 = pneg %p169
        %s299 = sand.u32 %s159, 1
        %s300 = scalar_lea.sflag [#allocation4], %s299
        %s301 = sand.u32 %s159, 1
        %s302 = smul.addr %s301, 48
        %s303 = scalar_lea.vmem [#allocation3], %s302
        %v304 = vld [vmem:[%s277] sm:$0xff]
        %v305 = vld [vmem:[%s277 + $0x8] sm:$0xff]
        %v306 = vld [vmem:[%s277 + $0x10] sm:$0xff]
        %v307 = vld [vmem:[%s277 + $0x18] sm:$0xff]
        %v308 = vld [vmem:[%s277 + $0x20] sm:$0xff]
        %v309 = vld [vmem:[%s277 + $0x28] sm:$0x3]
        %v310 = vld [vmem:[%s1] sm:$0xff]
        %v311 = vld [vmem:[%s1 + $0x8] sm:$0x3]
        %313 = vset.pattern.permute.xlu0 0
        %314 = vperm.xlu0 %313, %v310
        %v315 = vpop.permute.xlu0 %314
        %318 = vset.pattern.permute.xlu0 0
        %319 = vperm.xlu0 %318, %v311
        %v320 = vpop.permute.xlu0 %319
        %v322 = vlaneseq
        %v323 = vshrl.u32 %v322, 7
        %v324 = vsub.s32 0, %v323
        %v325 = vrot.slane %v304, %v324
        %v326 = vmul.f32 %v315, %v325
        %v327 = vmul.f32 %v320, %v325
        %v328 = vld [vmem:[%s3] sm:$0xff]
        %v329 = vld [vmem:[%s3 + $0x8] sm:$0x3]
        %331 = vset.pattern.permute.xlu0 0
        %332 = vperm.xlu0 %331, %v328
        %v333 = vpop.permute.xlu0 %332
        %336 = vset.pattern.permute.xlu0 0
        %337 = vperm.xlu0 %336, %v329
        %v338 = vpop.permute.xlu0 %337
        %v340 = vadd.f32 %v326, %v333
        %v341 = vadd.f32 %v327, %v338
        %v342 = vmax.f32 %v340, 0.0
        %v343 = vmax.f32 %v341, 0.0
        %v344 = vld [vmem:[%s2] sm:$0xff]
        %v345 = vld [vmem:[%s2 + $0x8] sm:$0x3]
        %s346 = scalar_lea.vmem %s3, 16
        %v347 = vld [vmem:[%s346] sm:$0xff]
        %v348 = vld [vmem:[%s346 + $0x8] sm:$0x3]
        %350 = vset.pattern.permute.xlu0 0
        %351 = vperm.xlu0 %350, %v347
        %v352 = vpop.permute.xlu0 %351
        %355 = vset.pattern.permute.xlu0 0
        %356 = vperm.xlu0 %355, %v348
        %v357 = vpop.permute.xlu0 %356
        %vm359 = vcmask 80896
        %v361 = vsel %vm359, %v344, 0
        %v364 = vsel %vm359, %v345, 0
        %vm366 = vcmask 1041408
        %v368 = vsel %vm366, %v343, 0
        %370 = vmatprep.subr.mxu0 0.0
        %371 = vmatpush1.msra.mxu0 %v342
        %372 = vmatprep.subr.mxu0 0.0
        %373 = vmatpush1.msra.mxu0 %v368
        %374 = vmatprep.subr.mxu0 0.0
        %375 = vmatpush1.msra.mxu0 0.0
        %376 = vmatprep.subr.mxu0 0.0
        %377 = vmatpush1.msra.mxu0 0.0
        %378 = vmatprep.subr.mxu0 0.0
        %379 = vmatpush1.msra.mxu0 0.0
        %380 = vmatprep.subr.mxu0 0.0
        %381 = vmatpush1.msra.mxu0 0.0
        %382 = vmatprep.subr.mxu0 0.0
        %383 = vmatpush1.msra.mxu0 0.0
        %384 = vmatprep.subr.mxu0 0.0
        %385 = vmatpush1.msra.mxu0 0.0
        %386 = vmatprep.subr.mxu0 0.0
        %387 = vmatpush1.msra.mxu0 0.0
        %388 = vmatprep.subr.mxu0 0.0
        %389 = vmatpush1.msra.mxu0 0.0
        %390 = vmatprep.subr.mxu0 0.0
        %391 = vmatpush1.msra.mxu0 0.0
        %392 = vmatprep.subr.mxu0 0.0
        %393 = vmatpush1.msra.mxu0 0.0
        %394 = vmatprep.subr.mxu0 0.0
        %395 = vmatpush1.msra.mxu0 0.0
        %396 = vmatprep.subr.mxu0 0.0
        %397 = vmatpush1.msra.mxu0 0.0
        %398 = vmatprep.subr.mxu0 0.0
        %399 = vmatpush1.msra.mxu0 0.0
        %400 = vmatprep.subr.mxu0 0.0
        %401 = vmatpush1.msra.mxu0 0.0
        %402 = vmatprep.subr.mxu0 0.0
        %403 = vmatpush1.msra.mxu0 0.0
        %404 = vmatprep.subr.mxu0 0.0
        %405 = vmatpush1.msra.mxu0 0.0
        %406 = vmatprep.subr.mxu0 0.0
        %407 = vmatpush1.msra.mxu0 0.0
        %408 = vmatprep.subr.mxu0 0.0
        %409 = vmatpush1.msra.mxu0 0.0
        %410 = vmatprep.subr.mxu0 0.0
        %411 = vmatpush1.msra.mxu0 0.0
        %412 = vmatprep.subr.mxu0 0.0
        %413 = vmatpush1.msra.mxu0 0.0
        %414 = vmatprep.subr.mxu0 0.0
        %415 = vmatpush1.msra.mxu0 0.0
        %416 = vmatprep.subr.mxu0 0.0
        %417 = vmatpush1.msra.mxu0 0.0
        %418 = vmatprep.subr.mxu0 0.0
        %419 = vmatpush1.msra.mxu0 0.0
        %420 = vmatprep.subr.mxu0 0.0
        %421 = vmatpush1.msra.mxu0 0.0
        %422 = vmatprep.subr.mxu0 0.0
        %423 = vmatpush1.msra.mxu0 0.0
        %424 = vmatprep.subr.mxu0 0.0
        %425 = vmatpush1.msra.mxu0 0.0
        %426 = vmatprep.subr.mxu0 0.0
        %427 = vmatpush1.msra.mxu0 0.0
        %428 = vmatprep.subr.mxu0 0.0
        %429 = vmatpush1.msra.mxu0 0.0
        %430 = vmatprep.subr.mxu0 0.0
        %431 = vmatpush1.msra.mxu0 0.0
        %432 = vmatprep.subr.mxu0 0.0
        %433 = vmatpush1.msra.mxu0 0.0
        %434 = vmatprep.mubr.f32.mxu0 0.0
        %435 = vmatmul.mubr.f32.gmra.mrb[0].mxu0 %v361
        %v436 = vpop.f32.mrb[0].mxu0
        %v437 = vadd.f32 %v352, %v436
        %v438 = vpop.f32.mrb[0].mxu0
        %439 = vmatprep.mubr.f32.mxu0 0.0
        %440 = vmatmul.mubr.f32.gmra.mrb[0].mxu0 %v364
        %v441 = vpop.f32.mrb[0].mxu0
        %v442 = vadd.f32 %v357, %v441
        %v443 = vpop.f32.mrb[0].mxu0
        %444 = vdwg.mxu0
        %v445 = vmax.f32 %v437, 0.0
        %v446 = vmax.f32 %v442, 0.0
        %s447 = scalar_lea.vmem %s2, 16
        %v448 = vld [vmem:[%s447] sm:$0xff]
        %v449 = vld [vmem:[%s447 + $0x8] sm:$0x3]
        %s450 = scalar_lea.vmem %s3, 32
        %v451 = vld [vmem:[%s450] sm:$0xff]
        %v452 = vld [vmem:[%s450 + $0x8] sm:$0x3]
        %454 = vset.pattern.permute.xlu0 0
        %455 = vperm.xlu0 %454, %v451
        %v456 = vpop.permute.xlu0 %455
        %459 = vset.pattern.permute.xlu0 0
        %460 = vperm.xlu0 %459, %v452
        %v461 = vpop.permute.xlu0 %460
        %v464 = vsel %vm359, %v448, 0
        %v467 = vsel %vm359, %v449, 0
        %v470 = vsel %vm366, %v446, 0
        %472 = vmatprep.subr.mxu0 0.0
        %473 = vmatpush1.msra.mxu0 %v445
        %474 = vmatprep.subr.mxu0 0.0
        %475 = vmatpush1.msra.mxu0 %v470
        %476 = vmatprep.subr.mxu0 0.0
        %477 = vmatpush1.msra.mxu0 0.0
        %478 = vmatprep.subr.mxu0 0.0
        %479 = vmatpush1.msra.mxu0 0.0
        %480 = vmatprep.subr.mxu0 0.0
        %481 = vmatpush1.msra.mxu0 0.0
        %482 = vmatprep.subr.mxu0 0.0
        %483 = vmatpush1.msra.mxu0 0.0
        %484 = vmatprep.subr.mxu0 0.0
        %485 = vmatpush1.msra.mxu0 0.0
        %486 = vmatprep.subr.mxu0 0.0
        %487 = vmatpush1.msra.mxu0 0.0
        %488 = vmatprep.subr.mxu0 0.0
        %489 = vmatpush1.msra.mxu0 0.0
        %490 = vmatprep.subr.mxu0 0.0
        %491 = vmatpush1.msra.mxu0 0.0
        %492 = vmatprep.subr.mxu0 0.0
        %493 = vmatpush1.msra.mxu0 0.0
        %494 = vmatprep.subr.mxu0 0.0
        %495 = vmatpush1.msra.mxu0 0.0
        %496 = vmatprep.subr.mxu0 0.0
        %497 = vmatpush1.msra.mxu0 0.0
        %498 = vmatprep.subr.mxu0 0.0
        %499 = vmatpush1.msra.mxu0 0.0
        %500 = vmatprep.subr.mxu0 0.0
        %501 = vmatpush1.msra.mxu0 0.0
        %502 = vmatprep.subr.mxu0 0.0
        %503 = vmatpush1.msra.mxu0 0.0
        %504 = vmatprep.subr.mxu0 0.0
        %505 = vmatpush1.msra.mxu0 0.0
        %506 = vmatprep.subr.mxu0 0.0
        %507 = vmatpush1.msra.mxu0 0.0
        %508 = vmatprep.subr.mxu0 0.0
        %509 = vmatpush1.msra.mxu0 0.0
        %510 = vmatprep.subr.mxu0 0.0
        %511 = vmatpush1.msra.mxu0 0.0
        %512 = vmatprep.subr.mxu0 0.0
        %513 = vmatpush1.msra.mxu0 0.0
        %514 = vmatprep.subr.mxu0 0.0
        %515 = vmatpush1.msra.mxu0 0.0
        %516 = vmatprep.subr.mxu0 0.0
        %517 = vmatpush1.msra.mxu0 0.0
        %518 = vmatprep.subr.mxu0 0.0
        %519 = vmatpush1.msra.mxu0 0.0
        %520 = vmatprep.subr.mxu0 0.0
        %521 = vmatpush1.msra.mxu0 0.0
        %522 = vmatprep.subr.mxu0 0.0
        %523 = vmatpush1.msra.mxu0 0.0
        %524 = vmatprep.subr.mxu0 0.0
        %525 = vmatpush1.msra.mxu0 0.0
        %526 = vmatprep.subr.mxu0 0.0
        %527 = vmatpush1.msra.mxu0 0.0
        %528 = vmatprep.subr.mxu0 0.0
        %529 = vmatpush1.msra.mxu0 0.0
        %530 = vmatprep.subr.mxu0 0.0
        %531 = vmatpush1.msra.mxu0 0.0
        %532 = vmatprep.subr.mxu0 0.0
        %533 = vmatpush1.msra.mxu0 0.0
        %534 = vmatprep.subr.mxu0 0.0
        %535 = vmatpush1.msra.mxu0 0.0
        %536 = vmatprep.mubr.f32.mxu0 0.0
        %537 = vmatmul.mubr.f32.gmra.mrb[0].mxu0 %v464
        %v538 = vpop.f32.mrb[0].mxu0
        %v539 = vadd.f32 %v456, %v538
        %v540 = vpop.f32.mrb[0].mxu0
        %541 = vmatprep.mubr.f32.mxu0 0.0
        %542 = vmatmul.mubr.f32.gmra.mrb[0].mxu0 %v467
        %v543 = vpop.f32.mrb[0].mxu0
        %v544 = vadd.f32 %v461, %v543
        %v545 = vpop.f32.mrb[0].mxu0
        %546 = vdwg.mxu0
        %v547 = vmax.f32 %v539, 0.0
        %v548 = vmax.f32 %v544, 0.0
        %s549 = scalar_lea.vmem %s2, 32
        %v550 = vld [vmem:[%s549] sm:$0xff]
        %v551 = vld [vmem:[%s549 + $0x8] sm:$0x3]
        %s552 = scalar_lea.vmem %s3, 48
        %v553 = vld [vmem:[%s552] sm:$0xff]
        %v554 = vld [vmem:[%s552 + $0x8] sm:$0x3]
        %556 = vset.pattern.permute.xlu0 0
        %557 = vperm.xlu0 %556, %v553
        %v558 = vpop.permute.xlu0 %557
        %561 = vset.pattern.permute.xlu0 0
        %562 = vperm.xlu0 %561, %v554
        %v563 = vpop.permute.xlu0 %562
        %v566 = vsel %vm359, %v550, 0
        %v569 = vsel %vm359, %v551, 0
        %v572 = vsel %vm366, %v548, 0
        %574 = vmatprep.subr.mxu0 0.0
        %575 = vmatpush1.msra.mxu0 %v547
        %576 = vmatprep.subr.mxu0 0.0
        %577 = vmatpush1.msra.mxu0 %v572
        %578 = vmatprep.subr.mxu0 0.0
        %579 = vmatpush1.msra.mxu0 0.0
        %580 = vmatprep.subr.mxu0 0.0
        %581 = vmatpush1.msra.mxu0 0.0
        %582 = vmatprep.subr.mxu0 0.0
        %583 = vmatpush1.msra.mxu0 0.0
        %584 = vmatprep.subr.mxu0 0.0
        %585 = vmatpush1.msra.mxu0 0.0
        %586 = vmatprep.subr.mxu0 0.0
        %587 = vmatpush1.msra.mxu0 0.0
        %588 = vmatprep.subr.mxu0 0.0
        %589 = vmatpush1.msra.mxu0 0.0
        %590 = vmatprep.subr.mxu0 0.0
        %591 = vmatpush1.msra.mxu0 0.0
        %592 = vmatprep.subr.mxu0 0.0
        %593 = vmatpush1.msra.mxu0 0.0
        %594 = vmatprep.subr.mxu0 0.0
        %595 = vmatpush1.msra.mxu0 0.0
        %596 = vmatprep.subr.mxu0 0.0
        %597 = vmatpush1.msra.mxu0 0.0
        %598 = vmatprep.subr.mxu0 0.0
        %599 = vmatpush1.msra.mxu0 0.0
        %600 = vmatprep.subr.mxu0 0.0
        %601 = vmatpush1.msra.mxu0 0.0
        %602 = vmatprep.subr.mxu0 0.0
        %603 = vmatpush1.msra.mxu0 0.0
        %604 = vmatprep.subr.mxu0 0.0
        %605 = vmatpush1.msra.mxu0 0.0
        %606 = vmatprep.subr.mxu0 0.0
        %607 = vmatpush1.msra.mxu0 0.0
        %608 = vmatprep.subr.mxu0 0.0
        %609 = vmatpush1.msra.mxu0 0.0
        %610 = vmatprep.subr.mxu0 0.0
        %611 = vmatpush1.msra.mxu0 0.0
        %612 = vmatprep.subr.mxu0 0.0
        %613 = vmatpush1.msra.mxu0 0.0
        %614 = vmatprep.subr.mxu0 0.0
        %615 = vmatpush1.msra.mxu0 0.0
        %616 = vmatprep.subr.mxu0 0.0
        %617 = vmatpush1.msra.mxu0 0.0
        %618 = vmatprep.subr.mxu0 0.0
        %619 = vmatpush1.msra.mxu0 0.0
        %620 = vmatprep.subr.mxu0 0.0
        %621 = vmatpush1.msra.mxu0 0.0
        %622 = vmatprep.subr.mxu0 0.0
        %623 = vmatpush1.msra.mxu0 0.0
        %624 = vmatprep.subr.mxu0 0.0
        %625 = vmatpush1.msra.mxu0 0.0
        %626 = vmatprep.subr.mxu0 0.0
        %627 = vmatpush1.msra.mxu0 0.0
        %628 = vmatprep.subr.mxu0 0.0
        %629 = vmatpush1.msra.mxu0 0.0
        %630 = vmatprep.subr.mxu0 0.0
        %631 = vmatpush1.msra.mxu0 0.0
        %632 = vmatprep.subr.mxu0 0.0
        %633 = vmatpush1.msra.mxu0 0.0
        %634 = vmatprep.subr.mxu0 0.0
        %635 = vmatpush1.msra.mxu0 0.0
        %636 = vmatprep.subr.mxu0 0.0
        %637 = vmatpush1.msra.mxu0 0.0
        %638 = vmatprep.mubr.f32.mxu0 0.0
        %639 = vmatmul.mubr.f32.gmra.mrb[0].mxu0 %v566
        %v640 = vpop.f32.mrb[0].mxu0
        %v641 = vadd.f32 %v558, %v640
        %v642 = vpop.f32.mrb[0].mxu0
        %643 = vmatprep.mubr.f32.mxu0 0.0
        %644 = vmatmul.mubr.f32.gmra.mrb[0].mxu0 %v569
        %v645 = vpop.f32.mrb[0].mxu0
        %v646 = vadd.f32 %v563, %v645
        %v647 = vpop.f32.mrb[0].mxu0
        %648 = vdwg.mxu0
        %v649 = vmax.f32 %v641, 0.0
        %v650 = vmax.f32 %v646, 0.0
        %s651 = scalar_lea.vmem %s2, 48
        %v652 = vld [vmem:[%s651] sm:$0xff]
        %v653 = vld [vmem:[%s651 + $0x8] sm:$0x3]
        %s654 = scalar_lea.vmem %s3, 64
        %v655 = vld [vmem:[%s654] sm:$0xff]
        %v656 = vld [vmem:[%s654 + $0x8] sm:$0x3]
        %658 = vset.pattern.permute.xlu0 0
        %659 = vperm.xlu0 %658, %v655
        %v660 = vpop.permute.xlu0 %659
        %663 = vset.pattern.permute.xlu0 0
        %664 = vperm.xlu0 %663, %v656
        %v665 = vpop.permute.xlu0 %664
        %v668 = vsel %vm359, %v652, 0
        %v671 = vsel %vm359, %v653, 0
        %v674 = vsel %vm366, %v650, 0
        %676 = vmatprep.subr.mxu0 0.0
        %677 = vmatpush1.msra.mxu0 %v649
        %678 = vmatprep.subr.mxu0 0.0
        %679 = vmatpush1.msra.mxu0 %v674
        %680 = vmatprep.subr.mxu0 0.0
        %681 = vmatpush1.msra.mxu0 0.0
        %682 = vmatprep.subr.mxu0 0.0
        %683 = vmatpush1.msra.mxu0 0.0
        %684 = vmatprep.subr.mxu0 0.0
        %685 = vmatpush1.msra.mxu0 0.0
        %686 = vmatprep.subr.mxu0 0.0
        %687 = vmatpush1.msra.mxu0 0.0
        %688 = vmatprep.subr.mxu0 0.0
        %689 = vmatpush1.msra.mxu0 0.0
        %690 = vmatprep.subr.mxu0 0.0
        %691 = vmatpush1.msra.mxu0 0.0
        %692 = vmatprep.subr.mxu0 0.0
        %693 = vmatpush1.msra.mxu0 0.0
        %694 = vmatprep.subr.mxu0 0.0
        %695 = vmatpush1.msra.mxu0 0.0
        %696 = vmatprep.subr.mxu0 0.0
        %697 = vmatpush1.msra.mxu0 0.0
        %698 = vmatprep.subr.mxu0 0.0
        %699 = vmatpush1.msra.mxu0 0.0
        %700 = vmatprep.subr.mxu0 0.0
        %701 = vmatpush1.msra.mxu0 0.0
        %702 = vmatprep.subr.mxu0 0.0
        %703 = vmatpush1.msra.mxu0 0.0
        %704 = vmatprep.subr.mxu0 0.0
        %705 = vmatpush1.msra.mxu0 0.0
        %706 = vmatprep.subr.mxu0 0.0
        %707 = vmatpush1.msra.mxu0 0.0
        %708 = vmatprep.subr.mxu0 0.0
        %709 = vmatpush1.msra.mxu0 0.0
        %710 = vmatprep.subr.mxu0 0.0
        %711 = vmatpush1.msra.mxu0 0.0
        %712 = vmatprep.subr.mxu0 0.0
        %713 = vmatpush1.msra.mxu0 0.0
        %714 = vmatprep.subr.mxu0 0.0
        %715 = vmatpush1.msra.mxu0 0.0
        %716 = vmatprep.subr.mxu0 0.0
        %717 = vmatpush1.msra.mxu0 0.0
        %718 = vmatprep.subr.mxu0 0.0
        %719 = vmatpush1.msra.mxu0 0.0
        %720 = vmatprep.subr.mxu0 0.0
        %721 = vmatpush1.msra.mxu0 0.0
        %722 = vmatprep.subr.mxu0 0.0
        %723 = vmatpush1.msra.mxu0 0.0
        %724 = vmatprep.subr.mxu0 0.0
        %725 = vmatpush1.msra.mxu0 0.0
        %726 = vmatprep.subr.mxu0 0.0
        %727 = vmatpush1.msra.mxu0 0.0
        %728 = vmatprep.subr.mxu0 0.0
        %729 = vmatpush1.msra.mxu0 0.0
        %730 = vmatprep.subr.mxu0 0.0
        %731 = vmatpush1.msra.mxu0 0.0
        %732 = vmatprep.subr.mxu0 0.0
        %733 = vmatpush1.msra.mxu0 0.0
        %734 = vmatprep.subr.mxu0 0.0
        %735 = vmatpush1.msra.mxu0 0.0
        %736 = vmatprep.subr.mxu0 0.0
        %737 = vmatpush1.msra.mxu0 0.0
        %738 = vmatprep.subr.mxu0 0.0
        %739 = vmatpush1.msra.mxu0 0.0
        %740 = vmatprep.mubr.f32.mxu0 0.0
        %741 = vmatmul.mubr.f32.gmra.mrb[0].mxu0 %v668
        %v742 = vpop.f32.mrb[0].mxu0
        %v743 = vadd.f32 %v660, %v742
        %v744 = vpop.f32.mrb[0].mxu0
        %745 = vmatprep.mubr.f32.mxu0 0.0
        %746 = vmatmul.mubr.f32.gmra.mrb[0].mxu0 %v671
        %v747 = vpop.f32.mrb[0].mxu0
        %v748 = vadd.f32 %v665, %v747
        %v749 = vpop.f32.mrb[0].mxu0
        %750 = vdwg.mxu0
        %v751 = vld [vmem:[%s4] sm:$0xff]
        %v752 = vld [vmem:[%s4 + $0x8] sm:$0x3]
        %vm753 = vcmask 343040
        %v755 = vsel %vm753, %v751, 0
        %v758 = vsel %vm753, %v752, 0
        %v761 = vsel %vm366, %v309, 0
        %763 = vmatprep.subr.mxu0 0.0
        %764 = vmatpush1.msra.mxu0 %v304
        %765 = vmatprep.subr.mxu0 0.0
        %766 = vmatpush1.msra.mxu0 %v305
        %767 = vmatprep.subr.mxu0 0.0
        %768 = vmatpush1.msra.mxu0 %v306
        %769 = vmatprep.subr.mxu0 0.0
        %770 = vmatpush1.msra.mxu0 %v307
        %771 = vmatprep.subr.mxu0 0.0
        %772 = vmatpush1.msra.mxu0 %v308
        %773 = vmatprep.subr.mxu0 0.0
        %774 = vmatpush1.msra.mxu0 %v761
        %775 = vmatprep.subr.mxu0 0.0
        %776 = vmatpush1.msra.mxu0 0.0
        %777 = vmatprep.subr.mxu0 0.0
        %778 = vmatpush1.msra.mxu0 0.0
        %779 = vmatprep.subr.mxu0 0.0
        %780 = vmatpush1.msra.mxu0 0.0
        %781 = vmatprep.subr.mxu0 0.0
        %782 = vmatpush1.msra.mxu0 0.0
        %783 = vmatprep.subr.mxu0 0.0
        %784 = vmatpush1.msra.mxu0 0.0
        %785 = vmatprep.subr.mxu0 0.0
        %786 = vmatpush1.msra.mxu0 0.0
        %787 = vmatprep.subr.mxu0 0.0
        %788 = vmatpush1.msra.mxu0 0.0
        %789 = vmatprep.subr.mxu0 0.0
        %790 = vmatpush1.msra.mxu0 0.0
        %791 = vmatprep.subr.mxu0 0.0
        %792 = vmatpush1.msra.mxu0 0.0
        %793 = vmatprep.subr.mxu0 0.0
        %794 = vmatpush1.msra.mxu0 0.0
        %795 = vmatprep.subr.mxu0 0.0
        %796 = vmatpush1.msra.mxu0 0.0
        %797 = vmatprep.subr.mxu0 0.0
        %798 = vmatpush1.msra.mxu0 0.0
        %799 = vmatprep.subr.mxu0 0.0
        %800 = vmatpush1.msra.mxu0 0.0
        %801 = vmatprep.subr.mxu0 0.0
        %802 = vmatpush1.msra.mxu0 0.0
        %803 = vmatprep.subr.mxu0 0.0
        %804 = vmatpush1.msra.mxu0 0.0
        %805 = vmatprep.subr.mxu0 0.0
        %806 = vmatpush1.msra.mxu0 0.0
        %807 = vmatprep.subr.mxu0 0.0
        %808 = vmatpush1.msra.mxu0 0.0
        %809 = vmatprep.subr.mxu0 0.0
        %810 = vmatpush1.msra.mxu0 0.0
        %811 = vmatprep.subr.mxu0 0.0
        %812 = vmatpush1.msra.mxu0 0.0
        %813 = vmatprep.subr.mxu0 0.0
        %814 = vmatpush1.msra.mxu0 0.0
        %815 = vmatprep.subr.mxu0 0.0
        %816 = vmatpush1.msra.mxu0 0.0
        %817 = vmatprep.subr.mxu0 0.0
        %818 = vmatpush1.msra.mxu0 0.0
        %819 = vmatprep.subr.mxu0 0.0
        %820 = vmatpush1.msra.mxu0 0.0
        %821 = vmatprep.subr.mxu0 0.0
        %822 = vmatpush1.msra.mxu0 0.0
        %823 = vmatprep.subr.mxu0 0.0
        %824 = vmatpush1.msra.mxu0 0.0
        %825 = vmatprep.subr.mxu0 0.0
        %826 = vmatpush1.msra.mxu0 0.0
        %827 = vmatprep.mubr.f32.mxu0 0.0
        %828 = vmatmul.mubr.f32.gmra.mrb[0].mxu0 %v755
        %v829 = vpop.f32.mrb[0].mxu0
        %v830 = vadd.f32 0.0, %v829
        %v831 = vpop.f32.mrb[0].mxu0
        %832 = vmatprep.mubr.f32.mxu0 0.0
        %833 = vmatmul.mubr.f32.gmra.mrb[0].mxu0 %v758
        %v834 = vpop.f32.mrb[0].mxu0
        %v835 = vadd.f32 0.0, %v834
        %v836 = vpop.f32.mrb[0].mxu0
        %837 = vdwg.mxu0
        %v838 = vmul.f32 %v743, %v830
        %v839 = vmul.f32 %v748, %v835
        %v840 = vld [vmem:[%s5] sm:$0xff]
        %v841 = vld [vmem:[%s5 + $0x8] sm:$0xff]
        %v842 = vld [vmem:[%s5 + $0x10] sm:$0xff]
        %v843 = vld [vmem:[%s5 + $0x18] sm:$0xff]
        %v844 = vld [vmem:[%s5 + $0x20] sm:$0xff]
        %v845 = vld [vmem:[%s5 + $0x28] sm:$0x1]
        %v847 = vsel %vm359, %v840, 0
        %v850 = vsel %vm359, %v841, 0
        %v853 = vsel %vm359, %v842, 0
        %v856 = vsel %vm359, %v843, 0
        %v859 = vsel %vm359, %v844, 0
        %v862 = vsel %vm359, %v845, 0
        %v865 = vsel %vm366, %v839, 0
        %867 = vmatprep.subr.mxu0 0.0
        %868 = vmatpush1.msra.mxu0 %v838
        %869 = vmatprep.subr.mxu0 0.0
        %870 = vmatpush1.msra.mxu0 %v865
        %871 = vmatprep.subr.mxu0 0.0
        %872 = vmatpush1.msra.mxu0 0.0
        %873 = vmatprep.subr.mxu0 0.0
        %874 = vmatpush1.msra.mxu0 0.0
        %875 = vmatprep.subr.mxu0 0.0
        %876 = vmatpush1.msra.mxu0 0.0
        %877 = vmatprep.subr.mxu0 0.0
        %878 = vmatpush1.msra.mxu0 0.0
        %879 = vmatprep.subr.mxu0 0.0
        %880 = vmatpush1.msra.mxu0 0.0
        %881 = vmatprep.subr.mxu0 0.0
        %882 = vmatpush1.msra.mxu0 0.0
        %883 = vmatprep.subr.mxu0 0.0
        %884 = vmatpush1.msra.mxu0 0.0
        %885 = vmatprep.subr.mxu0 0.0
        %886 = vmatpush1.msra.mxu0 0.0
        %887 = vmatprep.subr.mxu0 0.0
        %888 = vmatpush1.msra.mxu0 0.0
        %889 = vmatprep.subr.mxu0 0.0
        %890 = vmatpush1.msra.mxu0 0.0
        %891 = vmatprep.subr.mxu0 0.0
        %892 = vmatpush1.msra.mxu0 0.0
        %893 = vmatprep.subr.mxu0 0.0
        %894 = vmatpush1.msra.mxu0 0.0
        %895 = vmatprep.subr.mxu0 0.0
        %896 = vmatpush1.msra.mxu0 0.0
        %897 = vmatprep.subr.mxu0 0.0
        %898 = vmatpush1.msra.mxu0 0.0
        %899 = vmatprep.subr.mxu0 0.0
        %900 = vmatpush1.msra.mxu0 0.0
        %901 = vmatprep.subr.mxu0 0.0
        %902 = vmatpush1.msra.mxu0 0.0
        %903 = vmatprep.subr.mxu0 0.0
        %904 = vmatpush1.msra.mxu0 0.0
        %905 = vmatprep.subr.mxu0 0.0
        %906 = vmatpush1.msra.mxu0 0.0
        %907 = vmatprep.subr.mxu0 0.0
        %908 = vmatpush1.msra.mxu0 0.0
        %909 = vmatprep.subr.mxu0 0.0
        %910 = vmatpush1.msra.mxu0 0.0
        %911 = vmatprep.subr.mxu0 0.0
        %912 = vmatpush1.msra.mxu0 0.0
        %913 = vmatprep.subr.mxu0 0.0
        %914 = vmatpush1.msra.mxu0 0.0
        %915 = vmatprep.subr.mxu0 0.0
        %916 = vmatpush1.msra.mxu0 0.0
        %917 = vmatprep.subr.mxu0 0.0
        %918 = vmatpush1.msra.mxu0 0.0
        %919 = vmatprep.subr.mxu0 0.0
        %920 = vmatpush1.msra.mxu0 0.0
        %921 = vmatprep.subr.mxu0 0.0
        %922 = vmatpush1.msra.mxu0 0.0
        %923 = vmatprep.subr.mxu0 0.0
        %924 = vmatpush1.msra.mxu0 0.0
        %925 = vmatprep.subr.mxu0 0.0
        %926 = vmatpush1.msra.mxu0 0.0
        %927 = vmatprep.subr.mxu0 0.0
        %928 = vmatpush1.msra.mxu0 0.0
        %929 = vmatprep.subr.mxu0 0.0
        %930 = vmatpush1.msra.mxu0 0.0
        %931 = vmatprep.mubr.f32.mxu0 0.0
        %932 = vmatmul.mubr.f32.gmra.mrb[0].mxu0 %v847
        %v933 = vpop.f32.mrb[0].mxu0
        %v934 = vadd.f32 0.0, %v933
        %v935 = vpop.f32.mrb[0].mxu0
        %936 = vmatprep.mubr.f32.mxu0 0.0
        %937 = vmatmul.mubr.f32.gmra.mrb[0].mxu0 %v850
        %v938 = vpop.f32.mrb[0].mxu0
        %v939 = vadd.f32 0.0, %v938
        %v940 = vpop.f32.mrb[0].mxu0
        %941 = vmatprep.mubr.f32.mxu0 0.0
        %942 = vmatmul.mubr.f32.gmra.mrb[0].mxu0 %v853
        %v943 = vpop.f32.mrb[0].mxu0
        %v944 = vadd.f32 0.0, %v943
        %v945 = vpop.f32.mrb[0].mxu0
        %946 = vmatprep.mubr.f32.mxu0 0.0
        %947 = vmatmul.mubr.f32.gmra.mrb[0].mxu0 %v856
        %v948 = vpop.f32.mrb[0].mxu0
        %v949 = vadd.f32 0.0, %v948
        %v950 = vpop.f32.mrb[0].mxu0
        %951 = vmatprep.mubr.f32.mxu0 0.0
        %952 = vmatmul.mubr.f32.gmra.mrb[0].mxu0 %v859
        %v953 = vpop.f32.mrb[0].mxu0
        %v954 = vadd.f32 0.0, %v953
        %v955 = vpop.f32.mrb[0].mxu0
        %956 = vmatprep.mubr.f32.mxu0 0.0
        %957 = vmatmul.mubr.f32.gmra.mrb[0].mxu0 %v862
        %v958 = vpop.f32.mrb[0].mxu0
        %v959 = vadd.f32 0.0, %v958
        %v960 = vpop.f32.mrb[0].mxu0
        %961 = vdwg.mxu0
        %962 = vst [vmem:[%s303] sm:$0xff] %v934
        %963 = vst [vmem:[%s303 + $0x8] sm:$0xff] %v939
        %964 = vst [vmem:[%s303 + $0x10] sm:$0xff] %v944
        %965 = vst [vmem:[%s303 + $0x18] sm:$0xff] %v949
        %966 = vst [vmem:[%s303 + $0x20] sm:$0xff] %v954
        %967 = vst [vmem:[%s303 + $0x28] sm:$0x1] %v959
        %s968 = sand.u32 %s159, 1
        %s969 = scalar_lea.sflag [#allocation4], %s968
        %s970 = sand.u32 %s159, 1
        %s971 = smul.addr %s970, 48
        %s972 = scalar_lea.vmem [#allocation3], %s971
        // Predicated region
        $region83: #{tpu_custom_call.1} parent=77 // pred_check
          %p973 = pneg %p169
        $region84: #{tpu_custom_call.1} parent=77 // pred_check_branch
          %975 = sbr.rel (%p973) target = $region86
        $region85: #{tpu_custom_call.1} parent=77 // pred_region
          %s977 = ssub.s32 768, 768
          %978 = vsyncadd %s969, %s977
          %s979 = smul.addr %s20, 128
          %s980 = scalar_lea.hbm %s6, %s979
          %s981 = sshll.u32 %s972, 4
          %s982 = int_to_ptr.vmem [resolvable:$true] %s981
          %987 = dma.vmem_to_hbm [thread:$0]  %s982, 768, %s980, %s969, 128, 256, 8
        $region86: #{tpu_custom_call.1} parent=77 // pred_fallthru
          _
      $region78: #{tpu_custom_call.1} parent=5 // pred_fallthru
        _
      %p988 = scmp.le.s32.totalorder 2, %s15
      // Predicated region
      $region87: #{tpu_custom_call.1} parent=5 // pred_check
        %p989 = pneg %p988
      $region88: #{tpu_custom_call.1} parent=5 // pred_check_branch
        %991 = sbr.rel (%p989) target = $region90
      $region89: #{tpu_custom_call.1} parent=5 // pred_region
        %s992 = ssub.s32 %s15, 2
        // Predicated region
        $region91: #{tpu_custom_call.1} parent=89 // pred_check
          %p993 = pneg %p175
        $region92: #{tpu_custom_call.1} parent=89 // pred_check_branch
          %995 = sbr.rel (%p993) target = $region94
        $region93: #{tpu_custom_call.1} parent=89 // pred_region
          %s996 = sand.u32 %s160, 1
          %s997 = scalar_lea.sflag [#allocation4], %s996
          %s998 = sand.u32 %s160, 1
          %s999 = smul.addr %s998, 48
          %s1000 = scalar_lea.vmem [#allocation3], %s999
          %1001 = dma.done %s997, 768
        $region94: #{tpu_custom_call.1} parent=89 // pred_fallthru
          _
      $region90: #{tpu_custom_call.1} parent=5 // pred_fallthru
        _
    $region6: #{tpu_custom_call.1} parent=1 // loop_footer
      %s19 = sadd.s32 1, %s15
    $region7: #{tpu_custom_call.1} parent=1 // loop_footer_branch
      %14 = sbr.rel target = $region3
    $region8: #{tpu_custom_call.1} parent=1 // loop_exit
      _
    %1002 = vsyncpa [#allocation4], 1
    %s1003 = scalar_lea.sflag [#allocation4], 1
    %1004 = vsyncpa %s1003, 1

</llo_original>
